<compile_context>
chip_gen: v7x
topology: tpu7x:2x2x1
jax: 0.10.0
libtpu: 0.0.40
codegen_flags: <defaults>
</compile_context>

<pallas_src>
import jax
import jax.numpy as jnp
from jax.experimental import pallas as pl
from jax.experimental.pallas import tpu as pltpu


# ----------------------------------------------------------------------------
# Kernel
# ----------------------------------------------------------------------------
def _film_kernel(x_ref, w_ref, b_ref, gamma_ref, beta_ref):
    """One MXU matmul for both heads, f32 accumulation, two lane-dense stores."""
    y = jnp.dot(x_ref[...], w_ref[...], preferred_element_type=jnp.float32)
    y = y + b_ref[...].astype(jnp.float32)          # (TM, 2*Ep), bias broadcast
    ep = gamma_ref.shape[-1]                         # static, multiple of 128
    gamma_ref[...] = y[:, :ep].astype(gamma_ref.dtype)
    beta_ref[...] = y[:, ep:].astype(beta_ref.dtype)


# ----------------------------------------------------------------------------
# One-time parameter preparation (hoist out of the per-call path)
# ----------------------------------------------------------------------------
def _round_up(x, m):
    return ((x + m - 1) // m) * m


def prepare_film_params(w_gamma, b_gamma, w_beta, b_beta, dtype=None):
    """Fuse + transpose + lane-pad the two Linear heads.

    w_gamma/w_beta : (E, 2E)  PyTorch Linear layout (out_features, in_features)
    b_gamma/b_beta : (E,)
    dtype          : optional I/O dtype (e.g. jnp.bfloat16 for 2x HBM savings)

    Returns W_cat (2E, 2*Ep), b_cat (1, 2*Ep) with Ep = round_up(E, 128);
    gamma occupies columns [0, E), beta occupies columns [Ep, Ep + E).
    """
    E, two_e = w_gamma.shape
    dt = dtype if dtype is not None else w_gamma.dtype
    ep = _round_up(E, 128)
    pad = ep - E

    wg_t = jnp.pad(w_gamma.T.astype(dt), ((0, 0), (0, pad)))   # (2E, Ep)
    wb_t = jnp.pad(w_beta.T.astype(dt), ((0, 0), (0, pad)))    # (2E, Ep)
    w_cat = jnp.concatenate([wg_t, wb_t], axis=1)               # (2E, 2*Ep)

    bg = jnp.pad(b_gamma.astype(dt), (0, pad))                  # (Ep,)
    bb = jnp.pad(b_beta.astype(dt), (0, pad))                   # (Ep,)
    b_cat = jnp.concatenate([bg, bb]).reshape(1, -1)            # (1, 2*Ep)
    return w_cat, b_cat


# ----------------------------------------------------------------------------
# Tiling / VMEM-budget selection
# ----------------------------------------------------------------------------
def _vmem_capacity_bytes():
    """Physical VMEM per TensorCore; conservative fallback if query fails."""
    try:
        info = pltpu.get_tpu_info()
        cap = getattr(info, "vmem_capacity_bytes", None)
        if cap:
            return int(cap)
    except Exception:
        pass
    return 64 * 1024 * 1024  # v7x per-TC size: safe lower bound everywhere


def _pick_tiling(B, k_cols, n_cols, itemsize):
    """Pick TM (rows per grid step) and an explicit vmem_limit_bytes.

    k_cols = 2E (matmul K), n_cols = 2*Ep (total padded output columns).
    """
    phys = _vmem_capacity_bytes()
    budget = min(phys // 2, 64 * 1024 * 1024)          # ~32 MiB v7x, 64 MiB v5e/v6e
    vmem_limit = min(budget * 3 // 2, phys * 3 // 4)   # explicit, > scoped default

    sub = 16 if itemsize == 2 else 8                   # bf16 sublane packing

    # Resident params counted 2x: Pallas may still double-buffer the
    # constant-index W_cat/b_cat specs.
    fixed = 2 * (k_cols * n_cols + n_cols) * itemsize
    if fixed > budget * 7 // 10:
        # TODO(synk): add a K/N-tiled grid path with an f32 VMEM accumulator
        # for very large emb_dim instead of VMEM-resident weights.
        raise NotImplementedError(
            f"FiLM weights ({fixed} B) do not fit the VMEM budget ({budget} B); "
            "K/N-tiled fallback not implemented.")

    # Per-row, double-buffered: x row (k_cols) + gamma/beta rows (n_cols total).
    per_row = 2 * (k_cols + n_cols) * itemsize
    tm = (budget - fixed) // max(per_row, 1)
    tm = max(sub, min(int(tm), 4096))
    tm = (tm // sub) * sub

    if B <= tm:
        if B >= 512:
            # Keep >= 2 grid steps so v7x's 2 TensorCores both get work.
            tm = _round_up(pl.cdiv(B, 2), sub)
        else:
            tm = B                                      # full-dim block is legal
    return int(tm), int(vmem_limit)


# ----------------------------------------------------------------------------
# Forward wrappers
# ----------------------------------------------------------------------------
def film_forward_fused(back_emb, w_cat, b_cat, emb_dim):
    """back_emb: (B, 2E); w_cat: (2E, 2*Ep); b_cat: (1, 2*Ep) -> (gamma, beta)."""
    B, two_e = back_emb.shape
    assert w_cat.shape[0] == two_e
    two_ep = w_cat.shape[1]
    ep = two_ep // 2
    io_dtype = w_cat.dtype
    x = back_emb.astype(io_dtype)                       # no-op if dtypes match

    TM, vmem_limit = _pick_tiling(B, two_e, two_ep, jnp.dtype(io_dtype).itemsize)
    grid = (pl.cdiv(B, TM),)

    gamma_p, beta_p = pl.pallas_call(
        _film_kernel,
        out_shape=(
            jax.ShapeDtypeStruct((B, ep), io_dtype),
            jax.ShapeDtypeStruct((B, ep), io_dtype),
        ),
        grid_spec=pltpu.PrefetchScalarGridSpec(
            num_scalar_prefetch=0,
            grid=grid,
            in_specs=[
                pl.BlockSpec((TM, two_e), lambda i: (i, 0)),      # x tile (pipelined)
                pl.BlockSpec((two_e, two_ep), lambda i: (0, 0)),  # W_cat (VMEM-resident)
                pl.BlockSpec((1, two_ep), lambda i: (0, 0)),      # b_cat (VMEM-resident)
            ],
            out_specs=[
                pl.BlockSpec((TM, ep), lambda i: (i, 0)),         # gamma (lane-dense)
                pl.BlockSpec((TM, ep), lambda i: (i, 0)),         # beta  (lane-dense)
            ],
        ),
        compiler_params=pltpu.CompilerParams(
            dimension_semantics=("parallel",),   # shards batch across v7x's 2 TCs
            vmem_limit_bytes=vmem_limit,
        ),
    )(x, w_cat, b_cat)

    # Zero-copy when E is already a multiple of 128; otherwise trim padding.
    if ep != emb_dim:
        gamma_p = gamma_p[:, :emb_dim]
        beta_p = beta_p[:, :emb_dim]
    return gamma_p, beta_p


def film_forward(back_emb, w_gamma, b_gamma, w_beta, b_beta):
    """Convenience wrapper matching the original module signature (prep not hoisted)."""
    emb_dim = w_gamma.shape[0]
    w_cat, b_cat = prepare_film_params(w_gamma, b_gamma, w_beta, b_beta)
    return film_forward_fused(back_emb, w_cat, b_cat, emb_dim)


# ----------------------------------------------------------------------------
# Self-test
# ----------------------------------------------------------------------------
if __name__ == "__main__":
    emb_dim = 32
    batch = 8

    key = jax.random.PRNGKey(0)
    k_x, k_wg, k_bg, k_wb, k_bb = jax.random.split(key, 5)

    back_emb = jax.random.normal(k_x, (batch, emb_dim * 2), dtype=jnp.float32)

    # Deterministic "PyTorch-like" init: uniform(-1/sqrt(fan_in), 1/sqrt(fan_in))
    fan_in = emb_dim * 2
    bound = 1.0 / (fan_in ** 0.5)
    w_gamma = jax.random.uniform(k_wg, (emb_dim, fan_in), jnp.float32, -bound, bound)
    b_gamma = jax.random.uniform(k_bg, (emb_dim,), jnp.float32, -bound, bound)
    w_beta = jax.random.uniform(k_wb, (emb_dim, fan_in), jnp.float32, -bound, bound)
    b_beta = jax.random.uniform(k_bb, (emb_dim,), jnp.float32, -bound, bound)

    # Plain-JAX reference (same semantics as torch.nn.Linear).
    gamma_ref = back_emb @ w_gamma.T + b_gamma
    beta_ref = back_emb @ w_beta.T + b_beta

    # ---- f32 path: matches the PyTorch module exactly --------------------
    w_cat, b_cat = prepare_film_params(w_gamma, b_gamma, w_beta, b_beta)
    jax.block_until_ready((w_cat, b_cat))
    gamma, beta = film_forward_fused(back_emb, w_cat, b_cat, emb_dim)
    jax.block_until_ready((gamma, beta))
    assert gamma.shape == (batch, emb_dim) and beta.shape == (batch, emb_dim)
    assert jnp.allclose(gamma, gamma_ref, atol=1e-5), "gamma mismatch (f32)"
    assert jnp.allclose(beta, beta_ref, atol=1e-5), "beta mismatch (f32)"

    # ---- bf16 I/O path: 2x HBM saving, f32 MXU accumulation ---------------
    w_cat_bf, b_cat_bf = prepare_film_params(
        w_gamma, b_gamma, w_beta, b_beta, dtype=jnp.bfloat16)
    jax.block_until_ready((w_cat_bf, b_cat_bf))
    gamma_bf, beta_bf = film_forward_fused(back_emb, w_cat_bf, b_cat_bf, emb_dim)
    jax.block_until_ready((gamma_bf, beta_bf))
    assert jnp.allclose(gamma_bf.astype(jnp.float32), gamma_ref, atol=5e-2), \
        "gamma mismatch (bf16)"
    assert jnp.allclose(beta_bf.astype(jnp.float32), beta_ref, atol=5e-2), \
        "beta mismatch (bf16)"

    print("KERNEL_OK")
</pallas_src>

<mosaic_0001>
module attributes {stable_mosaic.version = 11 : i64} {
  func.func @_film_kernel(%arg0: i32, %arg1: memref<8x64xf32, #tpu.memory_space<vmem>>, %arg2: memref<64x256xf32, #tpu.memory_space<vmem>>, %arg3: memref<1x256xf32, #tpu.memory_space<vmem>>, %arg4: memref<8x128xf32, #tpu.memory_space<vmem>>, %arg5: memref<8x128xf32, #tpu.memory_space<vmem>>) attributes {dimension_semantics = [#tpu.dimension_semantics<parallel>], iteration_bounds = array<i64: 1>, scalar_prefetch = 0 : i64, scratch_operands = 0 : i64, tpu.core_type = #tpu.core_type<tc>, window_params = [{transform_indices = @transform_0, window_bounds = array<i64: 8, 64>}, {pipeline_mode = #tpu.pipeline_mode<synchronous>, transform_indices = @transform_1, window_bounds = array<i64: 64, 256>}, {pipeline_mode = #tpu.pipeline_mode<synchronous>, transform_indices = @transform_2, window_bounds = array<i64: 1, 256>}, {transform_indices = @transform_3, window_bounds = array<i64: 8, 128>}, {transform_indices = @transform_4, window_bounds = array<i64: 8, 128>}]} {
    %c0 = arith.constant 0 : index
    %c0_0 = arith.constant 0 : index
    %0 = vector.load %arg1[%c0, %c0_0] : memref<8x64xf32, #tpu.memory_space<vmem>>, vector<8x64xf32>
    %c0_1 = arith.constant 0 : index
    %c0_2 = arith.constant 0 : index
    %1 = vector.load %arg2[%c0_1, %c0_2] : memref<64x256xf32, #tpu.memory_space<vmem>>, vector<64x256xf32>
    %cst = arith.constant dense<0.000000e+00> : vector<8x256xf32>
    %2 = tpu.matmul %0, %1, %cst {dimension_numbers = #tpu.dot_dimension_numbers<[1], [0], [0], [1], [0, 0, 1, 1], [], []>} : vector<8x64xf32>, vector<64x256xf32>, vector<8x256xf32> -> vector<8x256xf32>
    %c0_3 = arith.constant 0 : index
    %c0_4 = arith.constant 0 : index
    %3 = vector.load %arg3[%c0_3, %c0_4] : memref<1x256xf32, #tpu.memory_space<vmem>>, vector<1x256xf32>
    %4 = vector.broadcast %3 : vector<1x256xf32> to vector<8x256xf32>
    %5 = arith.addf %2, %4 : vector<8x256xf32>
    %6 = vector.extract_strided_slice %5 {offsets = [0, 0], sizes = [8, 128], strides = [1, 1]} : vector<8x256xf32> to vector<8x128xf32>
    %c0_5 = arith.constant 0 : index
    %c0_6 = arith.constant 0 : index
    %7 = vector.load %arg4[%c0_5, %c0_6] : memref<8x128xf32, #tpu.memory_space<vmem>>, vector<8x128xf32>
    tpu.vector_store %arg4[%c0_5, %c0_6], %6 {strides = array<i32>} : memref<8x128xf32, #tpu.memory_space<vmem>>, vector<8x128xf32>,
    %8 = vector.extract_strided_slice %5 {offsets = [0, 128], sizes = [8, 128], strides = [1, 1]} : vector<8x256xf32> to vector<8x128xf32>
    %c0_7 = arith.constant 0 : index
    %c0_8 = arith.constant 0 : index
    %9 = vector.load %arg5[%c0_7, %c0_8] : memref<8x128xf32, #tpu.memory_space<vmem>>, vector<8x128xf32>
    tpu.vector_store %arg5[%c0_7, %c0_8], %8 {strides = array<i32>} : memref<8x128xf32, #tpu.memory_space<vmem>>, vector<8x128xf32>,
    return
  }
  func.func @transform_0(%arg0: i32) -> (i32, i32) {
    %c0_i32 = arith.constant 0 : i32
    %c0_i32_0 = arith.constant 0 : i32
    return %arg0, %c0_i32 : i32, i32
  }
  func.func @transform_1(%arg0: i32) -> (i32, i32) {
    %c0_i32 = arith.constant 0 : i32
    %c0_i32_0 = arith.constant 0 : i32
    %c0_i32_1 = arith.constant 0 : i32
    return %c0_i32, %c0_i32_0 : i32, i32
  }
  func.func @transform_2(%arg0: i32) -> (i32, i32) {
    %c0_i32 = arith.constant 0 : i32
    %c0_i32_0 = arith.constant 0 : i32
    %c0_i32_1 = arith.constant 0 : i32
    return %c0_i32, %c0_i32_0 : i32, i32
  }
  func.func @transform_3(%arg0: i32) -> (i32, i32) {
    %c0_i32 = arith.constant 0 : i32
    %c0_i32_0 = arith.constant 0 : i32
    return %arg0, %c0_i32 : i32, i32
  }
  func.func @transform_4(%arg0: i32) -> (i32, i32) {
    %c0_i32 = arith.constant 0 : i32
    %c0_i32_0 = arith.constant 0 : i32
    return %arg0, %c0_i32 : i32, i32
  }
}

</mosaic_0001>

<llo_original>
// kernel: tpu_custom_call.1
$region0: #{tpu_custom_call.1}
  #allocation0 [shape = 'u32[]', space=smem, size = 0x4, offset = 0x4, fixed_abs, tag = 'smem constant byte address 0x4 - core index']
  #allocation1 [shape = 'u32[144,128]{1,0:T(1,128)}', space=vmem, size = 0x12000, scoped, tag = 'internal scratch']
  %s0 = inlined_call_operand.hbm [shape: f32[8,64], index: 0, kind: input, shape index: {}]
  %s1 = inlined_call_operand.hbm [shape: f32[64,256], index: 1, kind: input, shape index: {}]
  %s2 = inlined_call_operand.vmem [shape: f32[1,256], index: 2, kind: input, shape index: {}]
  %s3 = inlined_call_operand.hbm [shape: f32[8,128], index: 3, kind: output, shape index: {0}]
  %s4 = inlined_call_operand.hbm [shape: f32[8,128], index: 4, kind: output, shape index: {1}]
  %5 = xla_tuple %s3, %s4
  %s6 = sld [smem:[#allocation0]]
  $region38: #{tpu_custom_call.1} parent=0
    _
  %s8 = ssub.s32 1, %s6
  %s9 = scalar_select 0, %s8, %s6
  $region1: #{tpu_custom_call.1} parent=0
    #allocation2 [shape = 'u8[4096]{0}', space=vmem, size = 0x1000, scoped, tag = 'input window, operand 0, single buffered']
    #allocation3 [shape = 's32[1]{0}', space=sflag, size = 0x4, scoped, tag = 'scoped memory for tpu_custom_call.1']
    #allocation4 [shape = 's32[1]{0}', space=sflag, size = 0x4, scoped, tag = 'scoped memory for tpu_custom_call.1']
    #allocation5 [shape = 'u8[65536]{0}', space=vmem, size = 0x10000, scoped, tag = 'input window, operand 1, single buffered']
    #allocation6 [shape = 's32[1]{0}', space=sflag, size = 0x4, scoped, tag = 'scoped memory for tpu_custom_call.1']
    #allocation7 [shape = 'u8[4096]{0}', space=vmem, size = 0x1000, scoped, tag = 'output window, operand 0, single buffered']
    #allocation8 [shape = 'u8[4096]{0}', space=vmem, size = 0x1000, scoped, tag = 'output window, operand 1, single buffered']
    #allocation9 [shape = 's32[1]{0}', space=sflag, size = 0x4, scoped, tag = 'scoped memory for tpu_custom_call.1']
    %10 = vsyncpa [#allocation3], 0
    %11 = vsyncpa [#allocation6], 0
    %12 = vsyncpa [#allocation4], 0
    %13 = vsyncpa [#allocation9], 0
    // Predicated region
    $region2: #{tpu_custom_call.1} parent=1 // pred_check
      _
    $region3: #{tpu_custom_call.1} parent=1 // pred_check_branch
      %15 = sbr.rel (0) target = $region5
    $region4: #{tpu_custom_call.1} parent=1 // pred_region
      %s17 = ssub.s32 128, 128
      %18 = vsyncadd [#allocation3], %s17
      %s20 = sshll.u32 [#allocation2], 4
      %s21 = int_to_ptr.vmem [resolvable:$true] %s20
      %23 = dma.hbm_to_vmem [thread:$0]  %s0, 128, %s21, [#allocation3]
    $region5: #{tpu_custom_call.1} parent=1 // pred_fallthru
      _
    // Predicated region
    $region6: #{tpu_custom_call.1} parent=1 // pred_check
      _
    $region7: #{tpu_custom_call.1} parent=1 // pred_check_branch
      %25 = sbr.rel (0) target = $region9
    $region8: #{tpu_custom_call.1} parent=1 // pred_region
      %s27 = ssub.s32 2048, 2048
      %28 = vsyncadd [#allocation6], %s27
      %s29 = sshll.u32 [#allocation5], 4
      %s30 = int_to_ptr.vmem [resolvable:$true] %s29
      %35 = dma.hbm_to_vmem [thread:$0]  %s1, 2048, %s30, [#allocation6], 256, 256, 16
    $region9: #{tpu_custom_call.1} parent=1 // pred_fallthru
      _
    // Predicated region
    $region10: #{tpu_custom_call.1} parent=1 // pred_check
      _
    $region11: #{tpu_custom_call.1} parent=1 // pred_check_branch
      %37 = sbr.rel (0) target = $region13
    $region12: #{tpu_custom_call.1} parent=1 // pred_region
      _
    $region13: #{tpu_custom_call.1} parent=1 // pred_fallthru
      _
    // Predicated region
    $region14: #{tpu_custom_call.1} parent=1 // pred_check
      _
    $region15: #{tpu_custom_call.1} parent=1 // pred_check_branch
      %39 = sbr.rel (0) target = $region17
    $region16: #{tpu_custom_call.1} parent=1 // pred_region
      %40 = dma.done [#allocation3], 128
    $region17: #{tpu_custom_call.1} parent=1 // pred_fallthru
      _
    // Predicated region
    $region18: #{tpu_custom_call.1} parent=1 // pred_check
      _
    $region19: #{tpu_custom_call.1} parent=1 // pred_check_branch
      %42 = sbr.rel (0) target = $region21
    $region20: #{tpu_custom_call.1} parent=1 // pred_region
      %43 = dma.done [#allocation6], 2048
    $region21: #{tpu_custom_call.1} parent=1 // pred_fallthru
      _
    %v44 = vld [vmem:[#allocation2] sm:$0xff]
    %v45 = vld [vmem:[#allocation5] sm:$0xff]
    %v46 = vld [vmem:[#allocation5 + $0x8] sm:$0xff]
    %v47 = vld [vmem:[#allocation5 + $0x10] sm:$0xff]
    %v48 = vld [vmem:[#allocation5 + $0x18] sm:$0xff]
    %v49 = vld [vmem:[#allocation5 + $0x20] sm:$0xff]
    %v50 = vld [vmem:[#allocation5 + $0x28] sm:$0xff]
    %v51 = vld [vmem:[#allocation5 + $0x30] sm:$0xff]
    %v52 = vld [vmem:[#allocation5 + $0x38] sm:$0xff]
    %v53 = vld [vmem:[#allocation5 + $0x40] sm:$0xff]
    %v54 = vld [vmem:[#allocation5 + $0x48] sm:$0xff]
    %v55 = vld [vmem:[#allocation5 + $0x50] sm:$0xff]
    %v56 = vld [vmem:[#allocation5 + $0x58] sm:$0xff]
    %v57 = vld [vmem:[#allocation5 + $0x60] sm:$0xff]
    %v58 = vld [vmem:[#allocation5 + $0x68] sm:$0xff]
    %v59 = vld [vmem:[#allocation5 + $0x70] sm:$0xff]
    %v60 = vld [vmem:[#allocation5 + $0x78] sm:$0xff]
    %v61 = vld [vmem:[%s2] sm:$0x3]
    %v63 = vlaneseq
    %v64 = vshrl.u32 %v63, 7
    %v65 = vsub.s32 0, %v64
    %v66 = vrot.slane %v61, %v65
    %v67 = vlaneseq
    %v68 = vshrl.u32 %v67, 7
    %v69 = vsub.s32 1, %v68
    %v70 = vrot.slane %v61, %v69
    %vm73 = vcmask 523264
    %v75 = vsel %vm73, %v44, 0
    %77 = vmatprep.subr.mxu0 %v46
    %78 = vmatpush1.msra.mxu0 %v45
    %79 = vmatprep.subr.mxu0 %v48
    %80 = vmatpush1.msra.mxu0 %v47
    %81 = vmatprep.subr.mxu0 %v50
    %82 = vmatpush1.msra.mxu0 %v49
    %83 = vmatprep.subr.mxu0 %v52
    %84 = vmatpush1.msra.mxu0 %v51
    %85 = vmatprep.subr.mxu0 %v54
    %86 = vmatpush1.msra.mxu0 %v53
    %87 = vmatprep.subr.mxu0 %v56
    %88 = vmatpush1.msra.mxu0 %v55
    %89 = vmatprep.subr.mxu0 %v58
    %90 = vmatpush1.msra.mxu0 %v57
    %91 = vmatprep.subr.mxu0 %v60
    %92 = vmatpush1.msra.mxu0 %v59
    %93 = vmatprep.subr.mxu0 0.0
    %94 = vmatpush1.msra.mxu0 0.0
    %95 = vmatprep.subr.mxu0 0.0
    %96 = vmatpush1.msra.mxu0 0.0
    %97 = vmatprep.subr.mxu0 0.0
    %98 = vmatpush1.msra.mxu0 0.0
    %99 = vmatprep.subr.mxu0 0.0
    %100 = vmatpush1.msra.mxu0 0.0
    %101 = vmatprep.subr.mxu0 0.0
    %102 = vmatpush1.msra.mxu0 0.0
    %103 = vmatprep.subr.mxu0 0.0
    %104 = vmatpush1.msra.mxu0 0.0
    %105 = vmatprep.subr.mxu0 0.0
    %106 = vmatpush1.msra.mxu0 0.0
    %107 = vmatprep.subr.mxu0 0.0
    %108 = vmatpush1.msra.mxu0 0.0
    %109 = vmatprep.subr.mxu0 0.0
    %110 = vmatpush1.msra.mxu0 0.0
    %111 = vmatprep.subr.mxu0 0.0
    %112 = vmatpush1.msra.mxu0 0.0
    %113 = vmatprep.subr.mxu0 0.0
    %114 = vmatpush1.msra.mxu0 0.0
    %115 = vmatprep.subr.mxu0 0.0
    %116 = vmatpush1.msra.mxu0 0.0
    %117 = vmatprep.subr.mxu0 0.0
    %118 = vmatpush1.msra.mxu0 0.0
    %119 = vmatprep.subr.mxu0 0.0
    %120 = vmatpush1.msra.mxu0 0.0
    %121 = vmatprep.subr.mxu0 0.0
    %122 = vmatpush1.msra.mxu0 0.0
    %123 = vmatprep.subr.mxu0 0.0
    %124 = vmatpush1.msra.mxu0 0.0
    %125 = vmatprep.subr.mxu0 0.0
    %126 = vmatpush1.msra.mxu0 0.0
    %127 = vmatprep.subr.mxu0 0.0
    %128 = vmatpush1.msra.mxu0 0.0
    %129 = vmatprep.subr.mxu0 0.0
    %130 = vmatpush1.msra.mxu0 0.0
    %131 = vmatprep.subr.mxu0 0.0
    %132 = vmatpush1.msra.mxu0 0.0
    %133 = vmatprep.subr.mxu0 0.0
    %134 = vmatpush1.msra.mxu0 0.0
    %135 = vmatprep.subr.mxu0 0.0
    %136 = vmatpush1.msra.mxu0 0.0
    %137 = vmatprep.subr.mxu0 0.0
    %138 = vmatpush1.msra.mxu0 0.0
    %139 = vmatprep.subr.mxu0 0.0
    %140 = vmatpush1.msra.mxu0 0.0
    %141 = vmatprep.mubr.f32.mxu0 0.0
    %142 = vmatmul.mubr.f32.gmra.mrb[0].mxu0 %v75
    %v143 = vpop.f32.mrb[0].mxu0
    %v144 = vadd.f32 %v66, %v143
    %v145 = vpop.f32.mrb[0].mxu0
    %v146 = vadd.f32 %v70, %v145
    %147 = vdwg.mxu0
    %148 = vst [vmem:[#allocation7] sm:$0xff] %v144
    %149 = vst [vmem:[#allocation8] sm:$0xff] %v146
    // Predicated region
    $region22: #{tpu_custom_call.1} parent=1 // pred_check
      _
    $region23: #{tpu_custom_call.1} parent=1 // pred_check_branch
      %151 = sbr.rel (0) target = $region25
    $region24: #{tpu_custom_call.1} parent=1 // pred_region
      %s153 = ssub.s32 128, 128
      %154 = vsyncadd [#allocation4], %s153
      %s156 = sshll.u32 [#allocation7], 4
      %s157 = int_to_ptr.vmem [resolvable:$true] %s156
      %159 = dma.vmem_to_hbm [thread:$0]  %s157, 128, %s3, [#allocation4]
    $region25: #{tpu_custom_call.1} parent=1 // pred_fallthru
      _
    // Predicated region
    $region26: #{tpu_custom_call.1} parent=1 // pred_check
      _
    $region27: #{tpu_custom_call.1} parent=1 // pred_check_branch
      %161 = sbr.rel (0) target = $region29
    $region28: #{tpu_custom_call.1} parent=1 // pred_region
      %s163 = ssub.s32 128, 128
      %164 = vsyncadd [#allocation9], %s163
      %s166 = sshll.u32 [#allocation8], 4
      %s167 = int_to_ptr.vmem [resolvable:$true] %s166
      %169 = dma.vmem_to_hbm [thread:$0]  %s167, 128, %s4, [#allocation9]
    $region29: #{tpu_custom_call.1} parent=1 // pred_fallthru
      _
    // Predicated region
    $region30: #{tpu_custom_call.1} parent=1 // pred_check
      _
    $region31: #{tpu_custom_call.1} parent=1 // pred_check_branch
      %171 = sbr.rel (0) target = $region33
    $region32: #{tpu_custom_call.1} parent=1 // pred_region
      %172 = dma.done [#allocation4], 128
    $region33: #{tpu_custom_call.1} parent=1 // pred_fallthru
      _
    // Predicated region
    $region34: #{tpu_custom_call.1} parent=1 // pred_check
      _
    $region35: #{tpu_custom_call.1} parent=1 // pred_check_branch
      %174 = sbr.rel (0) target = $region37
    $region36: #{tpu_custom_call.1} parent=1 // pred_region
      %175 = dma.done [#allocation9], 128
    $region37: #{tpu_custom_call.1} parent=1 // pred_fallthru
      _
    %176 = vsyncpa [#allocation3], 1
    %177 = vsyncpa [#allocation6], 1
    %178 = vsyncpa [#allocation4], 1
    %179 = vsyncpa [#allocation9], 1

</llo_original>
